<compile_context>
chip_gen: v6e
topology: v6e:2x2x1
jax: 0.10.0
libtpu: 0.0.40
codegen_flags: <defaults>
</compile_context>

<pallas_src>
import jax
import jax.numpy as jnp
from jax.experimental import pallas as pl
from jax.experimental.pallas import tpu as pltpu


# ----------------------------- Pallas kernel ------------------------------ #
def _stacked_lstm_kernel(x_ref, h0_ref, c0_ref, w_ih0_ref, w_hh_ref,
                         w_ih_r_ref, b_ref, h1_ref, c1_ref):
    """Single invocation, all operands VMEM-resident.

    x_ref      : (B, I0)               layer-0 external input
    h0_ref     : (L, B, H)             previous hidden states
    c0_ref     : (L, B, H)             previous cell states
    w_ih0_ref  : (I0, 4H)              layer-0 input weights (transposed)
    w_hh_ref   : (L, H, 4H)            hidden weights (transposed)
    w_ih_r_ref : (max(L-1,1), H, 4H)   layers>=1 input weights (dummy if L==1)
    b_ref      : (L, 1, 4H) f32        combined bias (b_ih + b_hh)
    h1_ref     : (L, B, H)             new hidden states (aliases h_0 buffer)
    c1_ref     : (L, B, H)             new cell states  (aliases c_0 buffer)
    """
    L, _, H = h0_ref.shape
    w_dtype = w_hh_ref.dtype

    # Input-feeding carry lives in vregs; cast once to the matmul dtype.
    feed = x_ref[...].astype(w_dtype)                      # (B, I0)

    # Fully unrolled layer loop (L is small): straight-line code keeps the
    # serial input-feeding dependency chain entirely on-chip.
    for l in range(L):
        if l == 0:
            gi = jnp.dot(feed, w_ih0_ref[...],
                         preferred_element_type=jnp.float32)
        else:
            gi = jnp.dot(feed, w_ih_r_ref[l - 1],
                         preferred_element_type=jnp.float32)
        gh = jnp.dot(h0_ref[l].astype(w_dtype), w_hh_ref[l],
                     preferred_element_type=jnp.float32)
        gates = gi + gh + b_ref[l]                         # (B, 4H) f32

        i_g = jax.nn.sigmoid(gates[:, 0 * H:1 * H])
        f_g = jax.nn.sigmoid(gates[:, 1 * H:2 * H])
        g_g = jnp.tanh(gates[:, 2 * H:3 * H])
        o_g = jax.nn.sigmoid(gates[:, 3 * H:4 * H])

        c1 = f_g * c0_ref[l].astype(jnp.float32) + i_g * g_g
        h1 = o_g * jnp.tanh(c1)

        h1_ref[l] = h1.astype(h1_ref.dtype)
        c1_ref[l] = c1.astype(c1_ref.dtype)

        # Input feeding: next layer consumes this layer's h1.
        # (Inter-layer dropout is identity: eval mode / p = 0.)
        feed = h1.astype(w_dtype)


# --------------------------- parameter packing ----------------------------- #
def init_stacked_lstm_params(key, num_layers, input_size, rnn_size,
                             param_dtype=jnp.bfloat16):
    """Uniform +-1/sqrt(rnn_size) init (like torch.nn.LSTMCell), packed as
    w_ih0:(I0,4H), w_hh:(L,H,4H), w_ih_rest:(max(L-1,1),H,4H), b:(L,1,4H)f32.
    No zero-row padding is stored -- every weight byte streamed is real."""
    H = rnn_size
    bound = 1.0 / float(rnn_size) ** 0.5
    w_ih_list, w_hh_list, b_list = [], [], []
    in_sz = input_size
    for _ in range(num_layers):
        key, k1, k2, k3, k4 = jax.random.split(key, 5)
        w_ih = jax.random.uniform(k1, (in_sz, 4 * H), minval=-bound,
                                  maxval=bound, dtype=jnp.float32)
        w_hh = jax.random.uniform(k2, (H, 4 * H), minval=-bound,
                                  maxval=bound, dtype=jnp.float32)
        b_ih = jax.random.uniform(k3, (4 * H,), minval=-bound, maxval=bound,
                                  dtype=jnp.float32)
        b_hh = jax.random.uniform(k4, (4 * H,), minval=-bound, maxval=bound,
                                  dtype=jnp.float32)
        w_ih_list.append(w_ih)
        w_hh_list.append(w_hh)
        b_list.append((b_ih + b_hh)[None, :])
        in_sz = H
    if num_layers > 1:
        w_ih_rest = jnp.stack(w_ih_list[1:]).astype(param_dtype)
    else:  # dummy block, never read when L == 1
        w_ih_rest = jnp.zeros((1, H, 4 * H), param_dtype)
    return {
        "w_ih0": w_ih_list[0].astype(param_dtype),          # (I0, 4H)
        "w_hh": jnp.stack(w_hh_list).astype(param_dtype),   # (L, H, 4H)
        "w_ih_rest": w_ih_rest,                             # (max(L-1,1),H,4H)
        "b": jnp.stack(b_list).astype(jnp.float32),         # (L, 1, 4H)
    }


# --------------------------- StackedLSTM forward --------------------------- #
@jax.jit
def stacked_lstm_forward(params, input_feed, h_0, c_0):
    """Matches StackedLSTM.forward: returns (input_feed, (h_1, c_1)) with
    h_1, c_1 stacked over the layer axis -> (num_layers, B, rnn_size)."""
    L, B, H = h_0.shape
    I0 = input_feed.shape[1]
    w_ih0, w_hh = params["w_ih0"], params["w_hh"]
    w_ih_rest, b = params["w_ih_rest"], params["b"]

    w_itemsize = w_hh.dtype.itemsize
    w_bytes = (w_ih0.size + w_hh.size + w_ih_rest.size) * w_itemsize
    state_bytes = 2 * (h_0.size * h_0.dtype.itemsize
                       + c_0.size * c_0.dtype.itemsize)
    cost = pl.CostEstimate(
        flops=2 * B * 4 * H * (I0 + H + (L - 1) * 2 * H),
        transcendentals=5 * L * B * H,          # 3 sigmoid + 2 tanh per layer
        bytes_accessed=(w_bytes + b.size * 4 + state_bytes
                        + input_feed.size * input_feed.dtype.itemsize),
    )

    vmem_specs = [pl.BlockSpec(memory_space=pltpu.MemorySpace.VMEM)
                  for _ in range(7)]

    h_1, c_1 = pl.pallas_call(
        _stacked_lstm_kernel,
        out_shape=(
            jax.ShapeDtypeStruct((L, B, H), h_0.dtype),
            jax.ShapeDtypeStruct((L, B, H), c_0.dtype),
        ),
        in_specs=vmem_specs,
        out_specs=(pl.BlockSpec(memory_space=pltpu.MemorySpace.VMEM),
                   pl.BlockSpec(memory_space=pltpu.MemorySpace.VMEM)),
        # h_0 -> h_1, c_0 -> c_1 buffer reuse (donation contract documented
        # in the header comment).
        input_output_aliases={1: 0, 2: 1},
        cost_estimate=cost,
    )(input_feed, h_0, c_0, w_ih0, w_hh, w_ih_rest, b)

    return h_1[L - 1], (h_1, c_1)


# ----------------------------- reference check ----------------------------- #
def _ref_forward(params, input_feed, h_0, c_0):
    """Pure-JAX f32 reference on the packed params."""
    w_ih0 = params["w_ih0"].astype(jnp.float32)
    w_hh = params["w_hh"].astype(jnp.float32)
    w_ih_r = params["w_ih_rest"].astype(jnp.float32)
    b = params["b"].astype(jnp.float32)
    L, B, H = h_0.shape
    x = input_feed.astype(jnp.float32)
    hs, cs = [], []
    for l in range(L):
        w_ih = w_ih0 if l == 0 else w_ih_r[l - 1]
        gates = (jnp.dot(x, w_ih, precision=jax.lax.Precision.HIGHEST)
                 + jnp.dot(h_0[l], w_hh[l], precision=jax.lax.Precision.HIGHEST)
                 + b[l])
        i = jax.nn.sigmoid(gates[:, 0 * H:1 * H])
        f = jax.nn.sigmoid(gates[:, 1 * H:2 * H])
        g = jnp.tanh(gates[:, 2 * H:3 * H])
        o = jax.nn.sigmoid(gates[:, 3 * H:4 * H])
        c1 = f * c_0[l] + i * g
        h1 = o * jnp.tanh(c1)
        hs.append(h1)
        cs.append(c1)
        x = h1
    return hs[-1], (jnp.stack(hs), jnp.stack(cs))


if __name__ == "__main__":
    num_layers = 2
    input_size = 64
    rnn_size = 128
    batch = 8

    key = jax.random.PRNGKey(0)
    k_params, k_x, k_h, k_c = jax.random.split(key, 4)

    input_feed = jax.random.normal(k_x, (batch, input_size), jnp.float32)
    h_0 = jax.random.normal(k_h, (num_layers, batch, rnn_size), jnp.float32)
    c_0 = jax.random.normal(k_c, (num_layers, batch, rnn_size), jnp.float32)

    # ---- bf16-weight variant (production path: halves weight HBM traffic) --
    params_bf16 = init_stacked_lstm_params(k_params, num_layers, input_size,
                                           rnn_size, param_dtype=jnp.bfloat16)
    out, (h_1, c_1) = stacked_lstm_forward(params_bf16, input_feed, h_0, c_0)
    jax.block_until_ready((out, h_1, c_1))

    assert out.shape == (batch, rnn_size)
    assert h_1.shape == (num_layers, batch, rnn_size)
    assert c_1.shape == (num_layers, batch, rnn_size)

    ref_out, (ref_h, ref_c) = _ref_forward(params_bf16, input_feed, h_0, c_0)
    # bf16 activations/weights into the MXU -> loosened tolerance vs f32 ref.
    assert jnp.allclose(out, ref_out, atol=5e-2, rtol=5e-2)
    assert jnp.allclose(h_1, ref_h, atol=5e-2, rtol=5e-2)
    assert jnp.allclose(c_1, ref_c, atol=5e-2, rtol=5e-2)

    # ---- f32-weight variant: tight numerical check of the kernel itself ----
    params_f32 = init_stacked_lstm_params(k_params, num_layers, input_size,
                                          rnn_size, param_dtype=jnp.float32)
    out32, (h32, c32) = stacked_lstm_forward(params_f32, input_feed, h_0, c_0)
    jax.block_until_ready((out32, h32, c32))
    r_out, (r_h, r_c) = _ref_forward(params_f32, input_feed, h_0, c_0)
    assert jnp.allclose(out32, r_out, atol=1e-3, rtol=1e-3)
    assert jnp.allclose(h32, r_h, atol=1e-3, rtol=1e-3)
    assert jnp.allclose(c32, r_c, atol=1e-3, rtol=1e-3)

    print("KERNEL_OK")
</pallas_src>

<mosaic_0001>
module attributes {stable_mosaic.version = 11 : i64} {
  func.func @_stacked_lstm_kernel(%arg0: memref<8x64xf32, #tpu.memory_space<vmem>>, %arg1: memref<2x8x128xf32, #tpu.memory_space<vmem>>, %arg2: memref<2x8x128xf32, #tpu.memory_space<vmem>>, %arg3: memref<64x512xbf16, #tpu.memory_space<vmem>>, %arg4: memref<2x128x512xbf16, #tpu.memory_space<vmem>>, %arg5: memref<1x128x512xbf16, #tpu.memory_space<vmem>>, %arg6: memref<2x1x512xf32, #tpu.memory_space<vmem>>, %arg7: memref<2x8x128xf32, #tpu.memory_space<vmem>>, %arg8: memref<2x8x128xf32, #tpu.memory_space<vmem>>) attributes {dimension_semantics = [], scalar_prefetch = 0 : i64, scratch_operands = 0 : i64, tpu.core_type = #tpu.core_type<tc>} {
    %c0 = arith.constant 0 : index
    %c0_0 = arith.constant 0 : index
    %0 = vector.load %arg0[%c0, %c0_0] : memref<8x64xf32, #tpu.memory_space<vmem>>, vector<8x64xf32>
    %1 = arith.truncf %0 : vector<8x64xf32> to vector<8x64xbf16>
    %c0_1 = arith.constant 0 : index
    %c0_2 = arith.constant 0 : index
    %2 = vector.load %arg3[%c0_1, %c0_2] : memref<64x512xbf16, #tpu.memory_space<vmem>>, vector<64x512xbf16>
    %cst = arith.constant dense<0.000000e+00> : vector<8x512xf32>
    %3 = tpu.matmul %1, %2, %cst {dimension_numbers = #tpu.dot_dimension_numbers<[1], [0], [0], [1], [0, 0, 1, 1], [], []>} : vector<8x64xbf16>, vector<64x512xbf16>, vector<8x512xf32> -> vector<8x512xf32>
    %c0_3 = arith.constant 0 : index
    %c0_4 = arith.constant 0 : index
    %c0_5 = arith.constant 0 : index
    %4 = vector.load %arg1[%c0_3, %c0_4, %c0_5] : memref<2x8x128xf32, #tpu.memory_space<vmem>>, vector<1x8x128xf32>
    %5 = vector.shape_cast %4 : vector<1x8x128xf32> to vector<8x128xf32>
    %6 = arith.truncf %5 : vector<8x128xf32> to vector<8x128xbf16>
    %c0_6 = arith.constant 0 : index
    %c0_7 = arith.constant 0 : index
    %c0_8 = arith.constant 0 : index
    %7 = vector.load %arg4[%c0_6, %c0_7, %c0_8] : memref<2x128x512xbf16, #tpu.memory_space<vmem>>, vector<1x128x512xbf16>
    %8 = vector.shape_cast %7 : vector<1x128x512xbf16> to vector<128x512xbf16>
    %cst_9 = arith.constant dense<0.000000e+00> : vector<8x512xf32>
    %9 = tpu.matmul %6, %8, %cst_9 {dimension_numbers = #tpu.dot_dimension_numbers<[1], [0], [0], [1], [0, 0, 1, 1], [], []>} : vector<8x128xbf16>, vector<128x512xbf16>, vector<8x512xf32> -> vector<8x512xf32>
    %10 = arith.addf %3, %9 : vector<8x512xf32>
    %c0_10 = arith.constant 0 : index
    %c0_11 = arith.constant 0 : index
    %c0_12 = arith.constant 0 : index
    %11 = vector.load %arg6[%c0_10, %c0_11, %c0_12] : memref<2x1x512xf32, #tpu.memory_space<vmem>>, vector<1x1x512xf32>
    %12 = vector.shape_cast %11 : vector<1x1x512xf32> to vector<1x512xf32>
    %13 = vector.broadcast %12 : vector<1x512xf32> to vector<8x512xf32>
    %14 = arith.addf %10, %13 : vector<8x512xf32>
    %15 = vector.extract_strided_slice %14 {offsets = [0, 0], sizes = [8, 128], strides = [1, 1]} : vector<8x512xf32> to vector<8x128xf32>
    %16 = arith.negf %15 : vector<8x128xf32>
    %17 = math.exp %16 : vector<8x128xf32>
    %cst_13 = arith.constant 1.000000e+00 : f32
    %18 = vector.broadcast %cst_13 : f32 to vector<8x128xf32>
    %19 = arith.addf %18, %17 : vector<8x128xf32>
    %20 = arith.divf %18, %19 : vector<8x128xf32>
    %21 = vector.extract_strided_slice %14 {offsets = [0, 128], sizes = [8, 128], strides = [1, 1]} : vector<8x512xf32> to vector<8x128xf32>
    %22 = arith.negf %21 : vector<8x128xf32>
    %23 = math.exp %22 : vector<8x128xf32>
    %cst_14 = arith.constant 1.000000e+00 : f32
    %24 = vector.broadcast %cst_14 : f32 to vector<8x128xf32>
    %25 = arith.addf %24, %23 : vector<8x128xf32>
    %26 = arith.divf %24, %25 : vector<8x128xf32>
    %27 = vector.extract_strided_slice %14 {offsets = [0, 256], sizes = [8, 128], strides = [1, 1]} : vector<8x512xf32> to vector<8x128xf32>
    %28 = math.tanh %27 : vector<8x128xf32>
    %29 = vector.extract_strided_slice %14 {offsets = [0, 384], sizes = [8, 128], strides = [1, 1]} : vector<8x512xf32> to vector<8x128xf32>
    %30 = arith.negf %29 : vector<8x128xf32>
    %31 = math.exp %30 : vector<8x128xf32>
    %cst_15 = arith.constant 1.000000e+00 : f32
    %32 = vector.broadcast %cst_15 : f32 to vector<8x128xf32>
    %33 = arith.addf %32, %31 : vector<8x128xf32>
    %34 = arith.divf %32, %33 : vector<8x128xf32>
    %c0_16 = arith.constant 0 : index
    %c0_17 = arith.constant 0 : index
    %c0_18 = arith.constant 0 : index
    %35 = vector.load %arg2[%c0_16, %c0_17, %c0_18] : memref<2x8x128xf32, #tpu.memory_space<vmem>>, vector<1x8x128xf32>
    %36 = vector.shape_cast %35 : vector<1x8x128xf32> to vector<8x128xf32>
    %37 = arith.mulf %26, %36 : vector<8x128xf32>
    %38 = arith.mulf %20, %28 : vector<8x128xf32>
    %39 = arith.addf %37, %38 : vector<8x128xf32>
    %40 = math.tanh %39 : vector<8x128xf32>
    %41 = arith.mulf %34, %40 : vector<8x128xf32>
    %c0_19 = arith.constant 0 : index
    %c0_20 = arith.constant 0 : index
    %c0_21 = arith.constant 0 : index
    %42 = vector.load %arg7[%c0_19, %c0_20, %c0_21] : memref<2x8x128xf32, #tpu.memory_space<vmem>>, vector<1x8x128xf32>
    %43 = vector.shape_cast %42 : vector<1x8x128xf32> to vector<8x128xf32>
    %44 = vector.shape_cast %41 : vector<8x128xf32> to vector<1x8x128xf32>
    tpu.vector_store %arg7[%c0_19, %c0_20, %c0_21], %44 {strides = array<i32>} : memref<2x8x128xf32, #tpu.memory_space<vmem>>, vector<1x8x128xf32>,
    %c0_22 = arith.constant 0 : index
    %c0_23 = arith.constant 0 : index
    %c0_24 = arith.constant 0 : index
    %45 = vector.load %arg8[%c0_22, %c0_23, %c0_24] : memref<2x8x128xf32, #tpu.memory_space<vmem>>, vector<1x8x128xf32>
    %46 = vector.shape_cast %45 : vector<1x8x128xf32> to vector<8x128xf32>
    %47 = vector.shape_cast %39 : vector<8x128xf32> to vector<1x8x128xf32>
    tpu.vector_store %arg8[%c0_22, %c0_23, %c0_24], %47 {strides = array<i32>} : memref<2x8x128xf32, #tpu.memory_space<vmem>>, vector<1x8x128xf32>,
    %48 = arith.truncf %41 : vector<8x128xf32> to vector<8x128xbf16>
    %c0_25 = arith.constant 0 : index
    %c0_26 = arith.constant 0 : index
    %c0_27 = arith.constant 0 : index
    %49 = vector.load %arg5[%c0_25, %c0_26, %c0_27] : memref<1x128x512xbf16, #tpu.memory_space<vmem>>, vector<1x128x512xbf16>
    %50 = vector.shape_cast %49 : vector<1x128x512xbf16> to vector<128x512xbf16>
    %cst_28 = arith.constant dense<0.000000e+00> : vector<8x512xf32>
    %51 = tpu.matmul %48, %50, %cst_28 {dimension_numbers = #tpu.dot_dimension_numbers<[1], [0], [0], [1], [0, 0, 1, 1], [], []>} : vector<8x128xbf16>, vector<128x512xbf16>, vector<8x512xf32> -> vector<8x512xf32>
    %c1 = arith.constant 1 : index
    %c0_29 = arith.constant 0 : index
    %c0_30 = arith.constant 0 : index
    %52 = vector.load %arg1[%c1, %c0_29, %c0_30] : memref<2x8x128xf32, #tpu.memory_space<vmem>>, vector<1x8x128xf32>
    %53 = vector.shape_cast %52 : vector<1x8x128xf32> to vector<8x128xf32>
    %54 = arith.truncf %53 : vector<8x128xf32> to vector<8x128xbf16>
    %c1_31 = arith.constant 1 : index
    %c0_32 = arith.constant 0 : index
    %c0_33 = arith.constant 0 : index
    %55 = vector.load %arg4[%c1_31, %c0_32, %c0_33] : memref<2x128x512xbf16, #tpu.memory_space<vmem>>, vector<1x128x512xbf16>
    %56 = vector.shape_cast %55 : vector<1x128x512xbf16> to vector<128x512xbf16>
    %cst_34 = arith.constant dense<0.000000e+00> : vector<8x512xf32>
    %57 = tpu.matmul %54, %56, %cst_34 {dimension_numbers = #tpu.dot_dimension_numbers<[1], [0], [0], [1], [0, 0, 1, 1], [], []>} : vector<8x128xbf16>, vector<128x512xbf16>, vector<8x512xf32> -> vector<8x512xf32>
    %58 = arith.addf %51, %57 : vector<8x512xf32>
    %c1_35 = arith.constant 1 : index
    %c0_36 = arith.constant 0 : index
    %c0_37 = arith.constant 0 : index
    %59 = vector.load %arg6[%c1_35, %c0_36, %c0_37] : memref<2x1x512xf32, #tpu.memory_space<vmem>>, vector<1x1x512xf32>
    %60 = vector.shape_cast %59 : vector<1x1x512xf32> to vector<1x512xf32>
    %61 = vector.broadcast %60 : vector<1x512xf32> to vector<8x512xf32>
    %62 = arith.addf %58, %61 : vector<8x512xf32>
    %63 = vector.extract_strided_slice %62 {offsets = [0, 0], sizes = [8, 128], strides = [1, 1]} : vector<8x512xf32> to vector<8x128xf32>
    %64 = arith.negf %63 : vector<8x128xf32>
    %65 = math.exp %64 : vector<8x128xf32>
    %cst_38 = arith.constant 1.000000e+00 : f32
    %66 = vector.broadcast %cst_38 : f32 to vector<8x128xf32>
    %67 = arith.addf %66, %65 : vector<8x128xf32>
    %68 = arith.divf %66, %67 : vector<8x128xf32>
    %69 = vector.extract_strided_slice %62 {offsets = [0, 128], sizes = [8, 128], strides = [1, 1]} : vector<8x512xf32> to vector<8x128xf32>
    %70 = arith.negf %69 : vector<8x128xf32>
    %71 = math.exp %70 : vector<8x128xf32>
    %cst_39 = arith.constant 1.000000e+00 : f32
    %72 = vector.broadcast %cst_39 : f32 to vector<8x128xf32>
    %73 = arith.addf %72, %71 : vector<8x128xf32>
    %74 = arith.divf %72, %73 : vector<8x128xf32>
    %75 = vector.extract_strided_slice %62 {offsets = [0, 256], sizes = [8, 128], strides = [1, 1]} : vector<8x512xf32> to vector<8x128xf32>
    %76 = math.tanh %75 : vector<8x128xf32>
    %77 = vector.extract_strided_slice %62 {offsets = [0, 384], sizes = [8, 128], strides = [1, 1]} : vector<8x512xf32> to vector<8x128xf32>
    %78 = arith.negf %77 : vector<8x128xf32>
    %79 = math.exp %78 : vector<8x128xf32>
    %cst_40 = arith.constant 1.000000e+00 : f32
    %80 = vector.broadcast %cst_40 : f32 to vector<8x128xf32>
    %81 = arith.addf %80, %79 : vector<8x128xf32>
    %82 = arith.divf %80, %81 : vector<8x128xf32>
    %c1_41 = arith.constant 1 : index
    %c0_42 = arith.constant 0 : index
    %c0_43 = arith.constant 0 : index
    %83 = vector.load %arg2[%c1_41, %c0_42, %c0_43] : memref<2x8x128xf32, #tpu.memory_space<vmem>>, vector<1x8x128xf32>
    %84 = vector.shape_cast %83 : vector<1x8x128xf32> to vector<8x128xf32>
    %85 = arith.mulf %74, %84 : vector<8x128xf32>
    %86 = arith.mulf %68, %76 : vector<8x128xf32>
    %87 = arith.addf %85, %86 : vector<8x128xf32>
    %88 = math.tanh %87 : vector<8x128xf32>
    %89 = arith.mulf %82, %88 : vector<8x128xf32>
    %c1_44 = arith.constant 1 : index
    %c0_45 = arith.constant 0 : index
    %c0_46 = arith.constant 0 : index
    %90 = vector.load %arg7[%c1_44, %c0_45, %c0_46] : memref<2x8x128xf32, #tpu.memory_space<vmem>>, vector<1x8x128xf32>
    %91 = vector.shape_cast %90 : vector<1x8x128xf32> to vector<8x128xf32>
    %92 = vector.shape_cast %89 : vector<8x128xf32> to vector<1x8x128xf32>
    tpu.vector_store %arg7[%c1_44, %c0_45, %c0_46], %92 {strides = array<i32>} : memref<2x8x128xf32, #tpu.memory_space<vmem>>, vector<1x8x128xf32>,
    %c1_47 = arith.constant 1 : index
    %c0_48 = arith.constant 0 : index
    %c0_49 = arith.constant 0 : index
    %93 = vector.load %arg8[%c1_47, %c0_48, %c0_49] : memref<2x8x128xf32, #tpu.memory_space<vmem>>, vector<1x8x128xf32>
    %94 = vector.shape_cast %93 : vector<1x8x128xf32> to vector<8x128xf32>
    %95 = vector.shape_cast %87 : vector<8x128xf32> to vector<1x8x128xf32>
    tpu.vector_store %arg8[%c1_47, %c0_48, %c0_49], %95 {strides = array<i32>} : memref<2x8x128xf32, #tpu.memory_space<vmem>>, vector<1x8x128xf32>,
    return
  }
}

</mosaic_0001>

<llo_original>
// kernel: stacked_lstm_forward.1
$region0: #{stacked_lstm_forward.1}
  #allocation0 [shape = 'u32[]', space=smem, size = 0x4, offset = 0x4, fixed_abs, tag = 'smem constant byte address 0x4 - core index']
  #allocation1 [shape = 'u32[144,128]{1,0:T(1,128)}', space=vmem, size = 0x12000, scoped, tag = 'internal scratch']
  %s0 = inlined_call_operand.vmem [shape: f32[8,64], index: 0, kind: input, shape index: {}]
  %s1 = inlined_call_operand.vmem [shape: f32[2,8,128], index: 1, kind: input, shape index: {}, may-alias: {1,7}]
  %s2 = inlined_call_operand.vmem [shape: f32[2,8,128], index: 2, kind: input, shape index: {}, may-alias: {2,8}]
  %s3 = inlined_call_operand.hbm [shape: bf16[64,512], index: 3, kind: input, shape index: {}]
  %s4 = inlined_call_operand.hbm [shape: bf16[2,128,512], index: 4, kind: input, shape index: {}]
  %s5 = inlined_call_operand.hbm [shape: bf16[1,128,512], index: 5, kind: input, shape index: {}]
  %s6 = inlined_call_operand.vmem [shape: f32[2,1,512], index: 6, kind: input, shape index: {}]
  %s7 = inlined_call_operand.vmem [shape: f32[2,8,128], index: 7, kind: output, shape index: {0}, may-alias: {1,7}]
  %s8 = inlined_call_operand.vmem [shape: f32[2,8,128], index: 8, kind: output, shape index: {1}, may-alias: {2,8}]
  %9 = xla_tuple %s7, %s8
  %s10 = sld [smem:[#allocation0]]
  $region58: #{stacked_lstm_forward.1} parent=0
    _
  %s12 = ssub.s32 1, %s10
  %s13 = scalar_select 0, %s12, %s10
  $region1: #{stacked_lstm_forward.1} parent=0
    #allocation2 [shape = 'u8[65536]{0}', space=vmem, size = 0x10000, scoped, tag = 'input window, operand 3, single buffered']
    #allocation3 [shape = 's32[1]{0}', space=sflag, size = 0x4, scoped, tag = 'scoped memory for stacked_lstm_forward.1']
    #allocation4 [shape = 'u8[262144]{0}', space=vmem, size = 0x40000, scoped, tag = 'input window, operand 4, single buffered']
    #allocation5 [shape = 's32[1]{0}', space=sflag, size = 0x4, scoped, tag = 'scoped memory for stacked_lstm_forward.1']
    #allocation6 [shape = 'u8[131072]{0}', space=vmem, size = 0x20000, scoped, tag = 'input window, operand 5, single buffered']
    %14 = vsyncpa [#allocation3], 0
    %15 = vsyncpa [#allocation5], 0
    // Predicated region
    $region2: #{stacked_lstm_forward.1} parent=1 // pred_check
      _
    $region3: #{stacked_lstm_forward.1} parent=1 // pred_check_branch
      %17 = sbr.rel (0) target = $region5
    $region4: #{stacked_lstm_forward.1} parent=1 // pred_region
      _
    $region5: #{stacked_lstm_forward.1} parent=1 // pred_fallthru
      _
    // Predicated region
    $region6: #{stacked_lstm_forward.1} parent=1 // pred_check
      _
    $region7: #{stacked_lstm_forward.1} parent=1 // pred_check_branch
      %19 = sbr.rel (0) target = $region9
    $region8: #{stacked_lstm_forward.1} parent=1 // pred_region
      _
    $region9: #{stacked_lstm_forward.1} parent=1 // pred_fallthru
      _
    // Predicated region
    $region10: #{stacked_lstm_forward.1} parent=1 // pred_check
      _
    $region11: #{stacked_lstm_forward.1} parent=1 // pred_check_branch
      %21 = sbr.rel (0) target = $region13
    $region12: #{stacked_lstm_forward.1} parent=1 // pred_region
      _
    $region13: #{stacked_lstm_forward.1} parent=1 // pred_fallthru
      _
    // Predicated region
    $region14: #{stacked_lstm_forward.1} parent=1 // pred_check
      _
    $region15: #{stacked_lstm_forward.1} parent=1 // pred_check_branch
      %23 = sbr.rel (0) target = $region17
    $region16: #{stacked_lstm_forward.1} parent=1 // pred_region
      %s25 = ssub.s32 2048, 2048
      %26 = vsyncadd [#allocation3], %s25
      %s27 = sshll.u32 [#allocation2], 4
      %s28 = int_to_ptr.vmem [resolvable:$true] %s27
      %33 = dma.hbm_to_vmem [thread:$0]  %s3, 2048, %s28, [#allocation3], 256, 256, 16
    $region17: #{stacked_lstm_forward.1} parent=1 // pred_fallthru
      _
    // Predicated region
    $region18: #{stacked_lstm_forward.1} parent=1 // pred_check
      _
    $region19: #{stacked_lstm_forward.1} parent=1 // pred_check_branch
      %35 = sbr.rel (0) target = $region21
    $region20: #{stacked_lstm_forward.1} parent=1 // pred_region
      %s37 = ssub.s32 8192, 8192
      %38 = vsyncadd [#allocation5], %s37
      %s39 = sshll.u32 [#allocation4], 4
      %s40 = int_to_ptr.vmem [resolvable:$true] %s39
      %45 = dma.hbm_to_vmem [thread:$0]  %s4, 8192, %s40, [#allocation5], 256, 256, 16
    $region21: #{stacked_lstm_forward.1} parent=1 // pred_fallthru
      _
    // Predicated region
    $region22: #{stacked_lstm_forward.1} parent=1 // pred_check
      _
    $region23: #{stacked_lstm_forward.1} parent=1 // pred_check_branch
      %47 = sbr.rel (0) target = $region25
    $region24: #{stacked_lstm_forward.1} parent=1 // pred_region
      %s49 = ssub.s32 4096, 4096
      %50 = vsyncadd [#allocation5], %s49
      %s51 = sshll.u32 [#allocation6], 4
      %s52 = int_to_ptr.vmem [resolvable:$true] %s51
      %57 = dma.hbm_to_vmem [thread:$0]  %s5, 4096, %s52, [#allocation5], 256, 256, 16
    $region25: #{stacked_lstm_forward.1} parent=1 // pred_fallthru
      _
    // Predicated region
    $region26: #{stacked_lstm_forward.1} parent=1 // pred_check
      _
    $region27: #{stacked_lstm_forward.1} parent=1 // pred_check_branch
      %59 = sbr.rel (0) target = $region29
    $region28: #{stacked_lstm_forward.1} parent=1 // pred_region
      _
    $region29: #{stacked_lstm_forward.1} parent=1 // pred_fallthru
      _
    // Predicated region
    $region30: #{stacked_lstm_forward.1} parent=1 // pred_check
      _
    $region31: #{stacked_lstm_forward.1} parent=1 // pred_check_branch
      %61 = sbr.rel (0) target = $region33
    $region32: #{stacked_lstm_forward.1} parent=1 // pred_region
      %62 = dma.done [#allocation3], 2048
    $region33: #{stacked_lstm_forward.1} parent=1 // pred_fallthru
      _
    // Predicated region
    $region34: #{stacked_lstm_forward.1} parent=1 // pred_check
      _
    $region35: #{stacked_lstm_forward.1} parent=1 // pred_check_branch
      %64 = sbr.rel (0) target = $region37
    $region36: #{stacked_lstm_forward.1} parent=1 // pred_region
      %65 = dma.done [#allocation5], 8192
    $region37: #{stacked_lstm_forward.1} parent=1 // pred_fallthru
      _
    // Predicated region
    $region38: #{stacked_lstm_forward.1} parent=1 // pred_check
      _
    $region39: #{stacked_lstm_forward.1} parent=1 // pred_check_branch
      %67 = sbr.rel (0) target = $region41
    $region40: #{stacked_lstm_forward.1} parent=1 // pred_region
      %68 = dma.done [#allocation5], 4096
    $region41: #{stacked_lstm_forward.1} parent=1 // pred_fallthru
      _
    %v70 = vld [vmem:[%s0] sm:$0xff]
    %v71 = vpack.c.bf16 %v70, %v70
    %v72 = vld [vmem:[#allocation2] sm:$0xff]
    %v73 = vld [vmem:[#allocation2 + $0x8] sm:$0xff]
    %v74 = vld [vmem:[#allocation2 + $0x10] sm:$0xff]
    %v75 = vld [vmem:[#allocation2 + $0x18] sm:$0xff]
    %v76 = vld [vmem:[#allocation2 + $0x20] sm:$0xff]
    %v77 = vld [vmem:[#allocation2 + $0x28] sm:$0xff]
    %v78 = vld [vmem:[#allocation2 + $0x30] sm:$0xff]
    %v79 = vld [vmem:[#allocation2 + $0x38] sm:$0xff]
    %v80 = vld [vmem:[#allocation2 + $0x40] sm:$0xff]
    %v81 = vld [vmem:[#allocation2 + $0x48] sm:$0xff]
    %v82 = vld [vmem:[#allocation2 + $0x50] sm:$0xff]
    %v83 = vld [vmem:[#allocation2 + $0x58] sm:$0xff]
    %v84 = vld [vmem:[#allocation2 + $0x60] sm:$0xff]
    %v85 = vld [vmem:[#allocation2 + $0x68] sm:$0xff]
    %v86 = vld [vmem:[#allocation2 + $0x70] sm:$0xff]
    %v87 = vld [vmem:[#allocation2 + $0x78] sm:$0xff]
    %v88 = vld [vmem:[%s1] sm:$0xff]
    %v89 = vpack.c.bf16 %v88, %v88
    %v90 = vld [vmem:[#allocation4] sm:$0xff]
    %v91 = vld [vmem:[#allocation4 + $0x8] sm:$0xff]
    %v92 = vld [vmem:[#allocation4 + $0x10] sm:$0xff]
    %v93 = vld [vmem:[#allocation4 + $0x18] sm:$0xff]
    %v94 = vld [vmem:[#allocation4 + $0x20] sm:$0xff]
    %v95 = vld [vmem:[#allocation4 + $0x28] sm:$0xff]
    %v96 = vld [vmem:[#allocation4 + $0x30] sm:$0xff]
    %v97 = vld [vmem:[#allocation4 + $0x38] sm:$0xff]
    %v98 = vld [vmem:[#allocation4 + $0x40] sm:$0xff]
    %v99 = vld [vmem:[#allocation4 + $0x48] sm:$0xff]
    %v100 = vld [vmem:[#allocation4 + $0x50] sm:$0xff]
    %v101 = vld [vmem:[#allocation4 + $0x58] sm:$0xff]
    %v102 = vld [vmem:[#allocation4 + $0x60] sm:$0xff]
    %v103 = vld [vmem:[#allocation4 + $0x68] sm:$0xff]
    %v104 = vld [vmem:[#allocation4 + $0x70] sm:$0xff]
    %v105 = vld [vmem:[#allocation4 + $0x78] sm:$0xff]
    %v106 = vld [vmem:[#allocation4 + $0x80] sm:$0xff]
    %v107 = vld [vmem:[#allocation4 + $0x88] sm:$0xff]
    %v108 = vld [vmem:[#allocation4 + $0x90] sm:$0xff]
    %v109 = vld [vmem:[#allocation4 + $0x98] sm:$0xff]
    %v110 = vld [vmem:[#allocation4 + $0xa0] sm:$0xff]
    %v111 = vld [vmem:[#allocation4 + $0xa8] sm:$0xff]
    %v112 = vld [vmem:[#allocation4 + $0xb0] sm:$0xff]
    %v113 = vld [vmem:[#allocation4 + $0xb8] sm:$0xff]
    %v114 = vld [vmem:[#allocation4 + $0xc0] sm:$0xff]
    %v115 = vld [vmem:[#allocation4 + $0xc8] sm:$0xff]
    %v116 = vld [vmem:[#allocation4 + $0xd0] sm:$0xff]
    %v117 = vld [vmem:[#allocation4 + $0xd8] sm:$0xff]
    %v118 = vld [vmem:[#allocation4 + $0xe0] sm:$0xff]
    %v119 = vld [vmem:[#allocation4 + $0xe8] sm:$0xff]
    %v120 = vld [vmem:[#allocation4 + $0xf0] sm:$0xff]
    %v121 = vld [vmem:[#allocation4 + $0xf8] sm:$0xff]
    %v154 = vunpack.c.l.b16 %v90
    %v155 = vunpack.c.h.b16 %v90
    %v156 = vunpack.c.l.b16 %v91
    %v157 = vunpack.c.h.b16 %v91
    %v158 = vunpack.c.l.b16 %v92
    %v159 = vunpack.c.h.b16 %v92
    %v160 = vunpack.c.l.b16 %v93
    %v161 = vunpack.c.h.b16 %v93
    %v162 = vunpack.c.l.b16 %v94
    %v163 = vunpack.c.h.b16 %v94
    %v164 = vunpack.c.l.b16 %v95
    %v165 = vunpack.c.h.b16 %v95
    %v166 = vunpack.c.l.b16 %v96
    %v167 = vunpack.c.h.b16 %v96
    %v168 = vunpack.c.l.b16 %v97
    %v169 = vunpack.c.h.b16 %v97
    %v170 = vunpack.c.l.b16 %v98
    %v171 = vunpack.c.h.b16 %v98
    %v172 = vunpack.c.l.b16 %v99
    %v173 = vunpack.c.h.b16 %v99
    %v174 = vunpack.c.l.b16 %v100
    %v175 = vunpack.c.h.b16 %v100
    %v176 = vunpack.c.l.b16 %v101
    %v177 = vunpack.c.h.b16 %v101
    %v178 = vunpack.c.l.b16 %v102
    %v179 = vunpack.c.h.b16 %v102
    %v180 = vunpack.c.l.b16 %v103
    %v181 = vunpack.c.h.b16 %v103
    %v182 = vunpack.c.l.b16 %v104
    %v183 = vunpack.c.h.b16 %v104
    %v184 = vunpack.c.l.b16 %v105
    %v185 = vunpack.c.h.b16 %v105
    %v186 = vunpack.c.l.b16 %v106
    %v187 = vunpack.c.h.b16 %v106
    %v188 = vunpack.c.l.b16 %v107
    %v189 = vunpack.c.h.b16 %v107
    %v190 = vunpack.c.l.b16 %v108
    %v191 = vunpack.c.h.b16 %v108
    %v192 = vunpack.c.l.b16 %v109
    %v193 = vunpack.c.h.b16 %v109
    %v194 = vunpack.c.l.b16 %v110
    %v195 = vunpack.c.h.b16 %v110
    %v196 = vunpack.c.l.b16 %v111
    %v197 = vunpack.c.h.b16 %v111
    %v198 = vunpack.c.l.b16 %v112
    %v199 = vunpack.c.h.b16 %v112
    %v200 = vunpack.c.l.b16 %v113
    %v201 = vunpack.c.h.b16 %v113
    %v202 = vunpack.c.l.b16 %v114
    %v203 = vunpack.c.h.b16 %v114
    %v204 = vunpack.c.l.b16 %v115
    %v205 = vunpack.c.h.b16 %v115
    %v206 = vunpack.c.l.b16 %v116
    %v207 = vunpack.c.h.b16 %v116
    %v208 = vunpack.c.l.b16 %v117
    %v209 = vunpack.c.h.b16 %v117
    %v210 = vunpack.c.l.b16 %v118
    %v211 = vunpack.c.h.b16 %v118
    %v212 = vunpack.c.l.b16 %v119
    %v213 = vunpack.c.h.b16 %v119
    %v214 = vunpack.c.l.b16 %v120
    %v215 = vunpack.c.h.b16 %v120
    %v216 = vunpack.c.l.b16 %v121
    %v217 = vunpack.c.h.b16 %v121
    %v218 = vpack.c.b16 %v158, %v154
    %v219 = vpack.c.b16 %v159, %v155
    %v220 = vpack.c.b16 %v160, %v156
    %v221 = vpack.c.b16 %v161, %v157
    %v222 = vpack.c.b16 %v166, %v162
    %v223 = vpack.c.b16 %v167, %v163
    %v224 = vpack.c.b16 %v168, %v164
    %v225 = vpack.c.b16 %v169, %v165
    %v226 = vpack.c.b16 %v174, %v170
    %v227 = vpack.c.b16 %v175, %v171
    %v228 = vpack.c.b16 %v176, %v172
    %v229 = vpack.c.b16 %v177, %v173
    %v230 = vpack.c.b16 %v182, %v178
    %v231 = vpack.c.b16 %v183, %v179
    %v232 = vpack.c.b16 %v184, %v180
    %v233 = vpack.c.b16 %v185, %v181
    %v234 = vpack.c.b16 %v190, %v186
    %v235 = vpack.c.b16 %v191, %v187
    %v236 = vpack.c.b16 %v192, %v188
    %v237 = vpack.c.b16 %v193, %v189
    %v238 = vpack.c.b16 %v198, %v194
    %v239 = vpack.c.b16 %v199, %v195
    %v240 = vpack.c.b16 %v200, %v196
    %v241 = vpack.c.b16 %v201, %v197
    %v242 = vpack.c.b16 %v206, %v202
    %v243 = vpack.c.b16 %v207, %v203
    %v244 = vpack.c.b16 %v208, %v204
    %v245 = vpack.c.b16 %v209, %v205
    %v246 = vpack.c.b16 %v214, %v210
    %v247 = vpack.c.b16 %v215, %v211
    %v248 = vpack.c.b16 %v216, %v212
    %v249 = vpack.c.b16 %v217, %v213
    %282 = vmatprep.subr.bf16.mxu0 %v247
    %283 = vmatpush1.bf16.msra.mxu0 %v246
    %284 = vmatprep.subr.bf16.mxu0 %v243
    %285 = vmatpush1.bf16.msra.mxu0 %v242
    %286 = vmatprep.subr.bf16.mxu0 %v239
    %287 = vmatpush1.bf16.msra.mxu0 %v238
    %288 = vmatprep.subr.bf16.mxu0 %v235
    %289 = vmatpush1.bf16.msra.mxu0 %v234
    %290 = vmatprep.subr.bf16.mxu0 %v231
    %291 = vmatpush1.bf16.msra.mxu0 %v230
    %292 = vmatprep.subr.bf16.mxu0 %v227
    %293 = vmatpush1.bf16.msra.mxu0 %v226
    %294 = vmatprep.subr.bf16.mxu0 %v223
    %295 = vmatpush1.bf16.msra.mxu0 %v222
    %296 = vmatprep.subr.bf16.mxu0 %v219
    %297 = vmatpush1.bf16.msra.mxu0 %v218
    %298 = vmatprep.subr.bf16.mxu0 0
    %299 = vmatpush2.bf16.msra.mxu0 0
    %300 = vmatprep.subr.bf16.mxu0 0
    %301 = vmatpush2.bf16.msra.mxu0 0
    %302 = vmatprep.subr.bf16.mxu0 0
    %303 = vmatpush2.bf16.msra.mxu0 0
    %304 = vmatprep.subr.bf16.mxu0 0
    %305 = vmatpush2.bf16.msra.mxu0 0
    %306 = vmatprep.subr.bf16.mxu0 0
    %307 = vmatpush2.bf16.msra.mxu0 0
    %308 = vmatprep.subr.bf16.mxu0 0
    %309 = vmatpush2.bf16.msra.mxu0 0
    %310 = vmatprep.subr.bf16.mxu0 0
    %311 = vmatpush2.bf16.msra.mxu0 0
    %312 = vmatprep.subr.bf16.mxu0 0
    %313 = vmatpush2.bf16.msra.mxu0 0
    %314 = vmatprep.mubr.bf16.mxu0 0
    %315 = vmatmul.mubr.bf16.gmra.mxu0 %v89
    %v316 = vpop.f32.mrf.mxu0
    %v317 = vadd.f32 0.0, %v316
    %v318 = vpop.f32.mrf.mxu0
    %v319 = vadd.f32 0.0, %v318
    %v320 = vpop.f32.mrf.mxu0
    %v321 = vpop.f32.mrf.mxu0
    %322 = vdwg.mxu0
    %323 = vmatprep.subr.bf16.mxu0 %v249
    %324 = vmatpush1.bf16.msra.mxu0 %v248
    %325 = vmatprep.subr.bf16.mxu0 %v245
    %326 = vmatpush1.bf16.msra.mxu0 %v244
    %327 = vmatprep.subr.bf16.mxu0 %v241
    %328 = vmatpush1.bf16.msra.mxu0 %v240
    %329 = vmatprep.subr.bf16.mxu0 %v237
    %330 = vmatpush1.bf16.msra.mxu0 %v236
    %331 = vmatprep.subr.bf16.mxu0 %v233
    %332 = vmatpush1.bf16.msra.mxu0 %v232
    %333 = vmatprep.subr.bf16.mxu0 %v229
    %334 = vmatpush1.bf16.msra.mxu0 %v228
    %335 = vmatprep.subr.bf16.mxu0 %v225
    %336 = vmatpush1.bf16.msra.mxu0 %v224
    %337 = vmatprep.subr.bf16.mxu0 %v221
    %338 = vmatpush1.bf16.msra.mxu0 %v220
    %339 = vmatprep.subr.bf16.mxu0 0
    %340 = vmatpush2.bf16.msra.mxu0 0
    %341 = vmatprep.subr.bf16.mxu0 0
    %342 = vmatpush2.bf16.msra.mxu0 0
    %343 = vmatprep.subr.bf16.mxu0 0
    %344 = vmatpush2.bf16.msra.mxu0 0
    %345 = vmatprep.subr.bf16.mxu0 0
    %346 = vmatpush2.bf16.msra.mxu0 0
    %347 = vmatprep.subr.bf16.mxu0 0
    %348 = vmatpush2.bf16.msra.mxu0 0
    %349 = vmatprep.subr.bf16.mxu0 0
    %350 = vmatpush2.bf16.msra.mxu0 0
    %351 = vmatprep.subr.bf16.mxu0 0
    %352 = vmatpush2.bf16.msra.mxu0 0
    %353 = vmatprep.subr.bf16.mxu0 0
    %354 = vmatpush2.bf16.msra.mxu0 0
    %355 = vmatprep.mubr.bf16.mxu0 0
    %356 = vmatmul.mubr.bf16.gmra.mxu0 %v89
    %v357 = vpop.f32.mrf.mxu0
    %v358 = vadd.f32 0.0, %v357
    %v359 = vpop.f32.mrf.mxu0
    %v360 = vadd.f32 0.0, %v359
    %v361 = vpop.f32.mrf.mxu0
    %v362 = vpop.f32.mrf.mxu0
    %363 = vdwg.mxu0
    %v380 = vunpack.c.l.b16 %v72
    %v381 = vunpack.c.h.b16 %v72
    %v382 = vunpack.c.l.b16 %v73
    %v383 = vunpack.c.h.b16 %v73
    %v384 = vunpack.c.l.b16 %v74
    %v385 = vunpack.c.h.b16 %v74
    %v386 = vunpack.c.l.b16 %v75
    %v387 = vunpack.c.h.b16 %v75
    %v388 = vunpack.c.l.b16 %v76
    %v389 = vunpack.c.h.b16 %v76
    %v390 = vunpack.c.l.b16 %v77
    %v391 = vunpack.c.h.b16 %v77
    %v392 = vunpack.c.l.b16 %v78
    %v393 = vunpack.c.h.b16 %v78
    %v394 = vunpack.c.l.b16 %v79
    %v395 = vunpack.c.h.b16 %v79
    %v396 = vunpack.c.l.b16 %v80
    %v397 = vunpack.c.h.b16 %v80
    %v398 = vunpack.c.l.b16 %v81
    %v399 = vunpack.c.h.b16 %v81
    %v400 = vunpack.c.l.b16 %v82
    %v401 = vunpack.c.h.b16 %v82
    %v402 = vunpack.c.l.b16 %v83
    %v403 = vunpack.c.h.b16 %v83
    %v404 = vunpack.c.l.b16 %v84
    %v405 = vunpack.c.h.b16 %v84
    %v406 = vunpack.c.l.b16 %v85
    %v407 = vunpack.c.h.b16 %v85
    %v408 = vunpack.c.l.b16 %v86
    %v409 = vunpack.c.h.b16 %v86
    %v410 = vunpack.c.l.b16 %v87
    %v411 = vunpack.c.h.b16 %v87
    %v412 = vpack.c.b16 %v384, %v380
    %v413 = vpack.c.b16 %v385, %v381
    %v414 = vpack.c.b16 %v386, %v382
    %v415 = vpack.c.b16 %v387, %v383
    %v416 = vpack.c.b16 %v392, %v388
    %v417 = vpack.c.b16 %v393, %v389
    %v418 = vpack.c.b16 %v394, %v390
    %v419 = vpack.c.b16 %v395, %v391
    %v420 = vpack.c.b16 %v400, %v396
    %v421 = vpack.c.b16 %v401, %v397
    %v422 = vpack.c.b16 %v402, %v398
    %v423 = vpack.c.b16 %v403, %v399
    %v424 = vpack.c.b16 %v408, %v404
    %v425 = vpack.c.b16 %v409, %v405
    %v426 = vpack.c.b16 %v410, %v406
    %v427 = vpack.c.b16 %v411, %v407
    %vm444 = vcmask 523264
    %v446 = vsel %vm444, %v71, 0
    %448 = vmatprep.subr.bf16.mxu0 0
    %449 = vmatpush1.bf16.msra.mxu0 0
    %450 = vmatprep.subr.bf16.mxu0 0
    %451 = vmatpush1.bf16.msra.mxu0 0
    %452 = vmatprep.subr.bf16.mxu0 0
    %453 = vmatpush1.bf16.msra.mxu0 0
    %454 = vmatprep.subr.bf16.mxu0 0
    %455 = vmatpush1.bf16.msra.mxu0 0
    %456 = vmatprep.subr.bf16.mxu0 %v425
    %457 = vmatpush1.bf16.msra.mxu0 %v424
    %458 = vmatprep.subr.bf16.mxu0 %v421
    %459 = vmatpush1.bf16.msra.mxu0 %v420
    %460 = vmatprep.subr.bf16.mxu0 %v417
    %461 = vmatpush1.bf16.msra.mxu0 %v416
    %462 = vmatprep.subr.bf16.mxu0 %v413
    %463 = vmatpush1.bf16.msra.mxu0 %v412
    %464 = vmatprep.subr.bf16.mxu0 0
    %465 = vmatpush2.bf16.msra.mxu0 0
    %466 = vmatprep.subr.bf16.mxu0 0
    %467 = vmatpush2.bf16.msra.mxu0 0
    %468 = vmatprep.subr.bf16.mxu0 0
    %469 = vmatpush2.bf16.msra.mxu0 0
    %470 = vmatprep.subr.bf16.mxu0 0
    %471 = vmatpush2.bf16.msra.mxu0 0
    %472 = vmatprep.subr.bf16.mxu0 0
    %473 = vmatpush2.bf16.msra.mxu0 0
    %474 = vmatprep.subr.bf16.mxu0 0
    %475 = vmatpush2.bf16.msra.mxu0 0
    %476 = vmatprep.subr.bf16.mxu0 0
    %477 = vmatpush2.bf16.msra.mxu0 0
    %478 = vmatprep.subr.bf16.mxu0 0
    %479 = vmatpush2.bf16.msra.mxu0 0
    %480 = vmatprep.mubr.bf16.mxu0 0
    %481 = vmatmul.mubr.bf16.gmra.mxu0 %v446
    %v482 = vpop.f32.mrf.mxu0
    %v483 = vadd.f32 %v317, %v482
    %v484 = vpop.f32.mrf.mxu0
    %v485 = vadd.f32 %v319, %v484
    %v486 = vpop.f32.mrf.mxu0
    %v487 = vpop.f32.mrf.mxu0
    %488 = vdwg.mxu0
    %489 = vmatprep.subr.bf16.mxu0 0
    %490 = vmatpush1.bf16.msra.mxu0 0
    %491 = vmatprep.subr.bf16.mxu0 0
    %492 = vmatpush1.bf16.msra.mxu0 0
    %493 = vmatprep.subr.bf16.mxu0 0
    %494 = vmatpush1.bf16.msra.mxu0 0
    %495 = vmatprep.subr.bf16.mxu0 0
    %496 = vmatpush1.bf16.msra.mxu0 0
    %497 = vmatprep.subr.bf16.mxu0 %v427
    %498 = vmatpush1.bf16.msra.mxu0 %v426
    %499 = vmatprep.subr.bf16.mxu0 %v423
    %500 = vmatpush1.bf16.msra.mxu0 %v422
    %501 = vmatprep.subr.bf16.mxu0 %v419
    %502 = vmatpush1.bf16.msra.mxu0 %v418
    %503 = vmatprep.subr.bf16.mxu0 %v415
    %504 = vmatpush1.bf16.msra.mxu0 %v414
    %505 = vmatprep.subr.bf16.mxu0 0
    %506 = vmatpush2.bf16.msra.mxu0 0
    %507 = vmatprep.subr.bf16.mxu0 0
    %508 = vmatpush2.bf16.msra.mxu0 0
    %509 = vmatprep.subr.bf16.mxu0 0
    %510 = vmatpush2.bf16.msra.mxu0 0
    %511 = vmatprep.subr.bf16.mxu0 0
    %512 = vmatpush2.bf16.msra.mxu0 0
    %513 = vmatprep.subr.bf16.mxu0 0
    %514 = vmatpush2.bf16.msra.mxu0 0
    %515 = vmatprep.subr.bf16.mxu0 0
    %516 = vmatpush2.bf16.msra.mxu0 0
    %517 = vmatprep.subr.bf16.mxu0 0
    %518 = vmatpush2.bf16.msra.mxu0 0
    %519 = vmatprep.subr.bf16.mxu0 0
    %520 = vmatpush2.bf16.msra.mxu0 0
    %521 = vmatprep.mubr.bf16.mxu0 0
    %522 = vmatmul.mubr.bf16.gmra.mxu0 %v446
    %v523 = vpop.f32.mrf.mxu0
    %v524 = vadd.f32 %v358, %v523
    %v525 = vpop.f32.mrf.mxu0
    %v526 = vadd.f32 %v360, %v525
    %v527 = vpop.f32.mrf.mxu0
    %v528 = vpop.f32.mrf.mxu0
    %529 = vdwg.mxu0
    %v530 = vld [vmem:[%s6] sm:$0xf]
    %v532 = vlaneseq
    %v533 = vshrl.u32 %v532, 7
    %v534 = vsub.s32 0, %v533
    %v535 = vrot.slane %v530, %v534
    %v536 = vlaneseq
    %v537 = vshrl.u32 %v536, 7
    %v538 = vsub.s32 1, %v537
    %v539 = vrot.slane %v530, %v538
    %v540 = vlaneseq
    %v541 = vshrl.u32 %v540, 7
    %v542 = vsub.s32 2, %v541
    %v543 = vrot.slane %v530, %v542
    %v544 = vlaneseq
    %v545 = vshrl.u32 %v544, 7
    %v546 = vsub.s32 3, %v545
    %v547 = vrot.slane %v530, %v546
    %v552 = vadd.f32 %v483, %v535
    %v553 = vadd.f32 %v485, %v539
    %v554 = vadd.f32 %v524, %v543
    %v555 = vadd.f32 %v526, %v547
    %v556 = vxor.u32 %v552, 2147483648
    %v557 = vmul.f32 %v556, 1.442695
    %v558 = vpow.pop %v557
    %v559 = vadd.f32 %v558, 1.0
    %v560 = vrcp.pop %v559
    %v561 = vmul.f32 1.0, %v560
    %v562 = vxor.u32 %v553, 2147483648
    %v563 = vmul.f32 %v562, 1.442695
    %v564 = vpow.pop %v563
    %v565 = vadd.f32 %v564, 1.0
    %v566 = vrcp.pop %v565
    %v567 = vmul.f32 1.0, %v566
    %v568 = vtanh.pop %v554
    %v569 = vxor.u32 %v555, 2147483648
    %v570 = vmul.f32 %v569, 1.442695
    %v571 = vpow.pop %v570
    %v572 = vadd.f32 %v571, 1.0
    %v573 = vrcp.pop %v572
    %v574 = vmul.f32 1.0, %v573
    %v575 = vld [vmem:[%s2] sm:$0xff]
    %v576 = vmul.f32 %v567, %v575
    %v577 = vmul.f32 %v561, %v568
    %v578 = vadd.f32 %v576, %v577
    %v579 = vtanh.pop %v578
    %v580 = vmul.f32 %v574, %v579
    %581 = vst [vmem:[%s7] sm:$0xff] %v580
    %582 = vst [vmem:[%s8] sm:$0xff] %v578
    %v583 = vpack.c.bf16 %v580, %v580
    %v584 = vld [vmem:[#allocation6] sm:$0xff]
    %v585 = vld [vmem:[#allocation6 + $0x8] sm:$0xff]
    %v586 = vld [vmem:[#allocation6 + $0x10] sm:$0xff]
    %v587 = vld [vmem:[#allocation6 + $0x18] sm:$0xff]
    %v588 = vld [vmem:[#allocation6 + $0x20] sm:$0xff]
    %v589 = vld [vmem:[#allocation6 + $0x28] sm:$0xff]
    %v590 = vld [vmem:[#allocation6 + $0x30] sm:$0xff]
    %v591 = vld [vmem:[#allocation6 + $0x38] sm:$0xff]
    %v592 = vld [vmem:[#allocation6 + $0x40] sm:$0xff]
    %v593 = vld [vmem:[#allocation6 + $0x48] sm:$0xff]
    %v594 = vld [vmem:[#allocation6 + $0x50] sm:$0xff]
    %v595 = vld [vmem:[#allocation6 + $0x58] sm:$0xff]
    %v596 = vld [vmem:[#allocation6 + $0x60] sm:$0xff]
    %v597 = vld [vmem:[#allocation6 + $0x68] sm:$0xff]
    %v598 = vld [vmem:[#allocation6 + $0x70] sm:$0xff]
    %v599 = vld [vmem:[#allocation6 + $0x78] sm:$0xff]
    %v600 = vld [vmem:[#allocation6 + $0x80] sm:$0xff]
    %v601 = vld [vmem:[#allocation6 + $0x88] sm:$0xff]
    %v602 = vld [vmem:[#allocation6 + $0x90] sm:$0xff]
    %v603 = vld [vmem:[#allocation6 + $0x98] sm:$0xff]
    %v604 = vld [vmem:[#allocation6 + $0xa0] sm:$0xff]
    %v605 = vld [vmem:[#allocation6 + $0xa8] sm:$0xff]
    %v606 = vld [vmem:[#allocation6 + $0xb0] sm:$0xff]
    %v607 = vld [vmem:[#allocation6 + $0xb8] sm:$0xff]
    %v608 = vld [vmem:[#allocation6 + $0xc0] sm:$0xff]
    %v609 = vld [vmem:[#allocation6 + $0xc8] sm:$0xff]
    %v610 = vld [vmem:[#allocation6 + $0xd0] sm:$0xff]
    %v611 = vld [vmem:[#allocation6 + $0xd8] sm:$0xff]
    %v612 = vld [vmem:[#allocation6 + $0xe0] sm:$0xff]
    %v613 = vld [vmem:[#allocation6 + $0xe8] sm:$0xff]
    %v614 = vld [vmem:[#allocation6 + $0xf0] sm:$0xff]
    %v615 = vld [vmem:[#allocation6 + $0xf8] sm:$0xff]
    %s616 = scalar_lea.vmem %s1, 8
    %v617 = vld [vmem:[%s616] sm:$0xff]
    %v618 = vpack.c.bf16 %v617, %v617
    %s619 = scalar_lea.vmem [#allocation4], 256
    %v620 = vld [vmem:[%s619] sm:$0xff]
    %v621 = vld [vmem:[%s619 + $0x8] sm:$0xff]
    %v622 = vld [vmem:[%s619 + $0x10] sm:$0xff]
    %v623 = vld [vmem:[%s619 + $0x18] sm:$0xff]
    %v624 = vld [vmem:[%s619 + $0x20] sm:$0xff]
    %v625 = vld [vmem:[%s619 + $0x28] sm:$0xff]
    %v626 = vld [vmem:[%s619 + $0x30] sm:$0xff]
    %v627 = vld [vmem:[%s619 + $0x38] sm:$0xff]
    %v628 = vld [vmem:[%s619 + $0x40] sm:$0xff]
    %v629 = vld [vmem:[%s619 + $0x48] sm:$0xff]
    %v630 = vld [vmem:[%s619 + $0x50] sm:$0xff]
    %v631 = vld [vmem:[%s619 + $0x58] sm:$0xff]
    %v632 = vld [vmem:[%s619 + $0x60] sm:$0xff]
    %v633 = vld [vmem:[%s619 + $0x68] sm:$0xff]
    %v634 = vld [vmem:[%s619 + $0x70] sm:$0xff]
    %v635 = vld [vmem:[%s619 + $0x78] sm:$0xff]
    %v636 = vld [vmem:[%s619 + $0x80] sm:$0xff]
    %v637 = vld [vmem:[%s619 + $0x88] sm:$0xff]
    %v638 = vld [vmem:[%s619 + $0x90] sm:$0xff]
    %v639 = vld [vmem:[%s619 + $0x98] sm:$0xff]
    %v640 = vld [vmem:[%s619 + $0xa0] sm:$0xff]
    %v641 = vld [vmem:[%s619 + $0xa8] sm:$0xff]
    %v642 = vld [vmem:[%s619 + $0xb0] sm:$0xff]
    %v643 = vld [vmem:[%s619 + $0xb8] sm:$0xff]
    %v644 = vld [vmem:[%s619 + $0xc0] sm:$0xff]
    %v645 = vld [vmem:[%s619 + $0xc8] sm:$0xff]
    %v646 = vld [vmem:[%s619 + $0xd0] sm:$0xff]
    %v647 = vld [vmem:[%s619 + $0xd8] sm:$0xff]
    %v648 = vld [vmem:[%s619 + $0xe0] sm:$0xff]
    %v649 = vld [vmem:[%s619 + $0xe8] sm:$0xff]
    %v650 = vld [vmem:[%s619 + $0xf0] sm:$0xff]
    %v651 = vld [vmem:[%s619 + $0xf8] sm:$0xff]
    %v684 = vunpack.c.l.b16 %v620
    %v685 = vunpack.c.h.b16 %v620
    %v686 = vunpack.c.l.b16 %v621
    %v687 = vunpack.c.h.b16 %v621
    %v688 = vunpack.c.l.b16 %v622
    %v689 = vunpack.c.h.b16 %v622
    %v690 = vunpack.c.l.b16 %v623
    %v691 = vunpack.c.h.b16 %v623
    %v692 = vunpack.c.l.b16 %v624
    %v693 = vunpack.c.h.b16 %v624
    %v694 = vunpack.c.l.b16 %v625
    %v695 = vunpack.c.h.b16 %v625
    %v696 = vunpack.c.l.b16 %v626
    %v697 = vunpack.c.h.b16 %v626
    %v698 = vunpack.c.l.b16 %v627
    %v699 = vunpack.c.h.b16 %v627
    %v700 = vunpack.c.l.b16 %v628
    %v701 = vunpack.c.h.b16 %v628
    %v702 = vunpack.c.l.b16 %v629
    %v703 = vunpack.c.h.b16 %v629
    %v704 = vunpack.c.l.b16 %v630
    %v705 = vunpack.c.h.b16 %v630
    %v706 = vunpack.c.l.b16 %v631
    %v707 = vunpack.c.h.b16 %v631
    %v708 = vunpack.c.l.b16 %v632
    %v709 = vunpack.c.h.b16 %v632
    %v710 = vunpack.c.l.b16 %v633
    %v711 = vunpack.c.h.b16 %v633
    %v712 = vunpack.c.l.b16 %v634
    %v713 = vunpack.c.h.b16 %v634
    %v714 = vunpack.c.l.b16 %v635
    %v715 = vunpack.c.h.b16 %v635
    %v716 = vunpack.c.l.b16 %v636
    %v717 = vunpack.c.h.b16 %v636
    %v718 = vunpack.c.l.b16 %v637
    %v719 = vunpack.c.h.b16 %v637
    %v720 = vunpack.c.l.b16 %v638
    %v721 = vunpack.c.h.b16 %v638
    %v722 = vunpack.c.l.b16 %v639
    %v723 = vunpack.c.h.b16 %v639
    %v724 = vunpack.c.l.b16 %v640
    %v725 = vunpack.c.h.b16 %v640
    %v726 = vunpack.c.l.b16 %v641
    %v727 = vunpack.c.h.b16 %v641
    %v728 = vunpack.c.l.b16 %v642
    %v729 = vunpack.c.h.b16 %v642
    %v730 = vunpack.c.l.b16 %v643
    %v731 = vunpack.c.h.b16 %v643
    %v732 = vunpack.c.l.b16 %v644
    %v733 = vunpack.c.h.b16 %v644
    %v734 = vunpack.c.l.b16 %v645
    %v735 = vunpack.c.h.b16 %v645
    %v736 = vunpack.c.l.b16 %v646
    %v737 = vunpack.c.h.b16 %v646
    %v738 = vunpack.c.l.b16 %v647
    %v739 = vunpack.c.h.b16 %v647
    %v740 = vunpack.c.l.b16 %v648
    %v741 = vunpack.c.h.b16 %v648
    %v742 = vunpack.c.l.b16 %v649
    %v743 = vunpack.c.h.b16 %v649
    %v744 = vunpack.c.l.b16 %v650
    %v745 = vunpack.c.h.b16 %v650
    %v746 = vunpack.c.l.b16 %v651
    %v747 = vunpack.c.h.b16 %v651
    %v748 = vpack.c.b16 %v688, %v684
    %v749 = vpack.c.b16 %v689, %v685
    %v750 = vpack.c.b16 %v690, %v686
    %v751 = vpack.c.b16 %v691, %v687
    %v752 = vpack.c.b16 %v696, %v692
    %v753 = vpack.c.b16 %v697, %v693
    %v754 = vpack.c.b16 %v698, %v694
    %v755 = vpack.c.b16 %v699, %v695
    %v756 = vpack.c.b16 %v704, %v700
    %v757 = vpack.c.b16 %v705, %v701
    %v758 = vpack.c.b16 %v706, %v702
    %v759 = vpack.c.b16 %v707, %v703
    %v760 = vpack.c.b16 %v712, %v708
    %v761 = vpack.c.b16 %v713, %v709
    %v762 = vpack.c.b16 %v714, %v710
    %v763 = vpack.c.b16 %v715, %v711
    %v764 = vpack.c.b16 %v720, %v716
    %v765 = vpack.c.b16 %v721, %v717
    %v766 = vpack.c.b16 %v722, %v718
    %v767 = vpack.c.b16 %v723, %v719
    %v768 = vpack.c.b16 %v728, %v724
    %v769 = vpack.c.b16 %v729, %v725
    %v770 = vpack.c.b16 %v730, %v726
    %v771 = vpack.c.b16 %v731, %v727
    %v772 = vpack.c.b16 %v736, %v732
    %v773 = vpack.c.b16 %v737, %v733
    %v774 = vpack.c.b16 %v738, %v734
    %v775 = vpack.c.b16 %v739, %v735
    %v776 = vpack.c.b16 %v744, %v740
    %v777 = vpack.c.b16 %v745, %v741
    %v778 = vpack.c.b16 %v746, %v742
    %v779 = vpack.c.b16 %v747, %v743
    %812 = vmatprep.subr.bf16.mxu0 %v777
    %813 = vmatpush1.bf16.msra.mxu0 %v776
    %814 = vmatprep.subr.bf16.mxu0 %v773
    %815 = vmatpush1.bf16.msra.mxu0 %v772
    %816 = vmatprep.subr.bf16.mxu0 %v769
    %817 = vmatpush1.bf16.msra.mxu0 %v768
    %818 = vmatprep.subr.bf16.mxu0 %v765
    %819 = vmatpush1.bf16.msra.mxu0 %v764
    %820 = vmatprep.subr.bf16.mxu0 %v761
    %821 = vmatpush1.bf16.msra.mxu0 %v760
    %822 = vmatprep.subr.bf16.mxu0 %v757
    %823 = vmatpush1.bf16.msra.mxu0 %v756
    %824 = vmatprep.subr.bf16.mxu0 %v753
    %825 = vmatpush1.bf16.msra.mxu0 %v752
    %826 = vmatprep.subr.bf16.mxu0 %v749
    %827 = vmatpush1.bf16.msra.mxu0 %v748
    %828 = vmatprep.subr.bf16.mxu0 0
    %829 = vmatpush2.bf16.msra.mxu0 0
    %830 = vmatprep.subr.bf16.mxu0 0
    %831 = vmatpush2.bf16.msra.mxu0 0
    %832 = vmatprep.subr.bf16.mxu0 0
    %833 = vmatpush2.bf16.msra.mxu0 0
    %834 = vmatprep.subr.bf16.mxu0 0
    %835 = vmatpush2.bf16.msra.mxu0 0
    %836 = vmatprep.subr.bf16.mxu0 0
    %837 = vmatpush2.bf16.msra.mxu0 0
    %838 = vmatprep.subr.bf16.mxu0 0
    %839 = vmatpush2.bf16.msra.mxu0 0
    %840 = vmatprep.subr.bf16.mxu0 0
    %841 = vmatpush2.bf16.msra.mxu0 0
    %842 = vmatprep.subr.bf16.mxu0 0
    %843 = vmatpush2.bf16.msra.mxu0 0
    %844 = vmatprep.mubr.bf16.mxu0 0
    %845 = vmatmul.mubr.bf16.gmra.mxu0 %v618
    %v846 = vpop.f32.mrf.mxu0
    %v847 = vadd.f32 0.0, %v846
    %v848 = vpop.f32.mrf.mxu0
    %v849 = vadd.f32 0.0, %v848
    %v850 = vpop.f32.mrf.mxu0
    %v851 = vpop.f32.mrf.mxu0
    %852 = vdwg.mxu0
    %853 = vmatprep.subr.bf16.mxu0 %v779
    %854 = vmatpush1.bf16.msra.mxu0 %v778
    %855 = vmatprep.subr.bf16.mxu0 %v775
    %856 = vmatpush1.bf16.msra.mxu0 %v774
    %857 = vmatprep.subr.bf16.mxu0 %v771
    %858 = vmatpush1.bf16.msra.mxu0 %v770
    %859 = vmatprep.subr.bf16.mxu0 %v767
    %860 = vmatpush1.bf16.msra.mxu0 %v766
    %861 = vmatprep.subr.bf16.mxu0 %v763
    %862 = vmatpush1.bf16.msra.mxu0 %v762
    %863 = vmatprep.subr.bf16.mxu0 %v759
    %864 = vmatpush1.bf16.msra.mxu0 %v758
    %865 = vmatprep.subr.bf16.mxu0 %v755
    %866 = vmatpush1.bf16.msra.mxu0 %v754
    %867 = vmatprep.subr.bf16.mxu0 %v751
    %868 = vmatpush1.bf16.msra.mxu0 %v750
    %869 = vmatprep.subr.bf16.mxu0 0
    %870 = vmatpush2.bf16.msra.mxu0 0
    %871 = vmatprep.subr.bf16.mxu0 0
    %872 = vmatpush2.bf16.msra.mxu0 0
    %873 = vmatprep.subr.bf16.mxu0 0
    %874 = vmatpush2.bf16.msra.mxu0 0
    %875 = vmatprep.subr.bf16.mxu0 0
    %876 = vmatpush2.bf16.msra.mxu0 0
    %877 = vmatprep.subr.bf16.mxu0 0
    %878 = vmatpush2.bf16.msra.mxu0 0
    %879 = vmatprep.subr.bf16.mxu0 0
    %880 = vmatpush2.bf16.msra.mxu0 0
    %881 = vmatprep.subr.bf16.mxu0 0
    %882 = vmatpush2.bf16.msra.mxu0 0
    %883 = vmatprep.subr.bf16.mxu0 0
    %884 = vmatpush2.bf16.msra.mxu0 0
    %885 = vmatprep.mubr.bf16.mxu0 0
    %886 = vmatmul.mubr.bf16.gmra.mxu0 %v618
    %v887 = vpop.f32.mrf.mxu0
    %v888 = vadd.f32 0.0, %v887
    %v889 = vpop.f32.mrf.mxu0
    %v890 = vadd.f32 0.0, %v889
    %v891 = vpop.f32.mrf.mxu0
    %v892 = vpop.f32.mrf.mxu0
    %893 = vdwg.mxu0
    %v926 = vunpack.c.l.b16 %v584
    %v927 = vunpack.c.h.b16 %v584
    %v928 = vunpack.c.l.b16 %v585
    %v929 = vunpack.c.h.b16 %v585
    %v930 = vunpack.c.l.b16 %v586
    %v931 = vunpack.c.h.b16 %v586
    %v932 = vunpack.c.l.b16 %v587
    %v933 = vunpack.c.h.b16 %v587
    %v934 = vunpack.c.l.b16 %v588
    %v935 = vunpack.c.h.b16 %v588
    %v936 = vunpack.c.l.b16 %v589
    %v937 = vunpack.c.h.b16 %v589
    %v938 = vunpack.c.l.b16 %v590
    %v939 = vunpack.c.h.b16 %v590
    %v940 = vunpack.c.l.b16 %v591
    %v941 = vunpack.c.h.b16 %v591
    %v942 = vunpack.c.l.b16 %v592
    %v943 = vunpack.c.h.b16 %v592
    %v944 = vunpack.c.l.b16 %v593
    %v945 = vunpack.c.h.b16 %v593
    %v946 = vunpack.c.l.b16 %v594
    %v947 = vunpack.c.h.b16 %v594
    %v948 = vunpack.c.l.b16 %v595
    %v949 = vunpack.c.h.b16 %v595
    %v950 = vunpack.c.l.b16 %v596
    %v951 = vunpack.c.h.b16 %v596
    %v952 = vunpack.c.l.b16 %v597
    %v953 = vunpack.c.h.b16 %v597
    %v954 = vunpack.c.l.b16 %v598
    %v955 = vunpack.c.h.b16 %v598
    %v956 = vunpack.c.l.b16 %v599
    %v957 = vunpack.c.h.b16 %v599
    %v958 = vunpack.c.l.b16 %v600
    %v959 = vunpack.c.h.b16 %v600
    %v960 = vunpack.c.l.b16 %v601
    %v961 = vunpack.c.h.b16 %v601
    %v962 = vunpack.c.l.b16 %v602
    %v963 = vunpack.c.h.b16 %v602
    %v964 = vunpack.c.l.b16 %v603
    %v965 = vunpack.c.h.b16 %v603
    %v966 = vunpack.c.l.b16 %v604
    %v967 = vunpack.c.h.b16 %v604
    %v968 = vunpack.c.l.b16 %v605
    %v969 = vunpack.c.h.b16 %v605
    %v970 = vunpack.c.l.b16 %v606
    %v971 = vunpack.c.h.b16 %v606
    %v972 = vunpack.c.l.b16 %v607
    %v973 = vunpack.c.h.b16 %v607
    %v974 = vunpack.c.l.b16 %v608
    %v975 = vunpack.c.h.b16 %v608
    %v976 = vunpack.c.l.b16 %v609
    %v977 = vunpack.c.h.b16 %v609
    %v978 = vunpack.c.l.b16 %v610
    %v979 = vunpack.c.h.b16 %v610
    %v980 = vunpack.c.l.b16 %v611
    %v981 = vunpack.c.h.b16 %v611
    %v982 = vunpack.c.l.b16 %v612
    %v983 = vunpack.c.h.b16 %v612
    %v984 = vunpack.c.l.b16 %v613
    %v985 = vunpack.c.h.b16 %v613
    %v986 = vunpack.c.l.b16 %v614
    %v987 = vunpack.c.h.b16 %v614
    %v988 = vunpack.c.l.b16 %v615
    %v989 = vunpack.c.h.b16 %v615
    %v990 = vpack.c.b16 %v930, %v926
    %v991 = vpack.c.b16 %v931, %v927
    %v992 = vpack.c.b16 %v932, %v928
    %v993 = vpack.c.b16 %v933, %v929
    %v994 = vpack.c.b16 %v938, %v934
    %v995 = vpack.c.b16 %v939, %v935
    %v996 = vpack.c.b16 %v940, %v936
    %v997 = vpack.c.b16 %v941, %v937
    %v998 = vpack.c.b16 %v946, %v942
    %v999 = vpack.c.b16 %v947, %v943
    %v1000 = vpack.c.b16 %v948, %v944
    %v1001 = vpack.c.b16 %v949, %v945
    %v1002 = vpack.c.b16 %v954, %v950
    %v1003 = vpack.c.b16 %v955, %v951
    %v1004 = vpack.c.b16 %v956, %v952
    %v1005 = vpack.c.b16 %v957, %v953
    %v1006 = vpack.c.b16 %v962, %v958
    %v1007 = vpack.c.b16 %v963, %v959
    %v1008 = vpack.c.b16 %v964, %v960
    %v1009 = vpack.c.b16 %v965, %v961
    %v1010 = vpack.c.b16 %v970, %v966
    %v1011 = vpack.c.b16 %v971, %v967
    %v1012 = vpack.c.b16 %v972, %v968
    %v1013 = vpack.c.b16 %v973, %v969
    %v1014 = vpack.c.b16 %v978, %v974
    %v1015 = vpack.c.b16 %v979, %v975
    %v1016 = vpack.c.b16 %v980, %v976
    %v1017 = vpack.c.b16 %v981, %v977
    %v1018 = vpack.c.b16 %v986, %v982
    %v1019 = vpack.c.b16 %v987, %v983
    %v1020 = vpack.c.b16 %v988, %v984
    %v1021 = vpack.c.b16 %v989, %v985
    %1054 = vmatprep.subr.bf16.mxu0 %v1019
    %1055 = vmatpush1.bf16.msra.mxu0 %v1018
    %1056 = vmatprep.subr.bf16.mxu0 %v1015
    %1057 = vmatpush1.bf16.msra.mxu0 %v1014
    %1058 = vmatprep.subr.bf16.mxu0 %v1011
    %1059 = vmatpush1.bf16.msra.mxu0 %v1010
    %1060 = vmatprep.subr.bf16.mxu0 %v1007
    %1061 = vmatpush1.bf16.msra.mxu0 %v1006
    %1062 = vmatprep.subr.bf16.mxu0 %v1003
    %1063 = vmatpush1.bf16.msra.mxu0 %v1002
    %1064 = vmatprep.subr.bf16.mxu0 %v999
    %1065 = vmatpush1.bf16.msra.mxu0 %v998
    %1066 = vmatprep.subr.bf16.mxu0 %v995
    %1067 = vmatpush1.bf16.msra.mxu0 %v994
    %1068 = vmatprep.subr.bf16.mxu0 %v991
    %1069 = vmatpush1.bf16.msra.mxu0 %v990
    %1070 = vmatprep.subr.bf16.mxu0 0
    %1071 = vmatpush2.bf16.msra.mxu0 0
    %1072 = vmatprep.subr.bf16.mxu0 0
    %1073 = vmatpush2.bf16.msra.mxu0 0
    %1074 = vmatprep.subr.bf16.mxu0 0
    %1075 = vmatpush2.bf16.msra.mxu0 0
    %1076 = vmatprep.subr.bf16.mxu0 0
    %1077 = vmatpush2.bf16.msra.mxu0 0
    %1078 = vmatprep.subr.bf16.mxu0 0
    %1079 = vmatpush2.bf16.msra.mxu0 0
    %1080 = vmatprep.subr.bf16.mxu0 0
    %1081 = vmatpush2.bf16.msra.mxu0 0
    %1082 = vmatprep.subr.bf16.mxu0 0
    %1083 = vmatpush2.bf16.msra.mxu0 0
    %1084 = vmatprep.subr.bf16.mxu0 0
    %1085 = vmatpush2.bf16.msra.mxu0 0
    %1086 = vmatprep.mubr.bf16.mxu0 0
    %1087 = vmatmul.mubr.bf16.gmra.mxu0 %v583
    %v1088 = vpop.f32.mrf.mxu0
    %v1089 = vadd.f32 %v847, %v1088
    %v1090 = vpop.f32.mrf.mxu0
    %v1091 = vadd.f32 %v849, %v1090
    %v1092 = vpop.f32.mrf.mxu0
    %v1093 = vpop.f32.mrf.mxu0
    %1094 = vdwg.mxu0
    %1095 = vmatprep.subr.bf16.mxu0 %v1021
    %1096 = vmatpush1.bf16.msra.mxu0 %v1020
    %1097 = vmatprep.subr.bf16.mxu0 %v1017
    %1098 = vmatpush1.bf16.msra.mxu0 %v1016
    %1099 = vmatprep.subr.bf16.mxu0 %v1013
    %1100 = vmatpush1.bf16.msra.mxu0 %v1012
    %1101 = vmatprep.subr.bf16.mxu0 %v1009
    %1102 = vmatpush1.bf16.msra.mxu0 %v1008
    %1103 = vmatprep.subr.bf16.mxu0 %v1005
    %1104 = vmatpush1.bf16.msra.mxu0 %v1004
    %1105 = vmatprep.subr.bf16.mxu0 %v1001
    %1106 = vmatpush1.bf16.msra.mxu0 %v1000
    %1107 = vmatprep.subr.bf16.mxu0 %v997
    %1108 = vmatpush1.bf16.msra.mxu0 %v996
    %1109 = vmatprep.subr.bf16.mxu0 %v993
    %1110 = vmatpush1.bf16.msra.mxu0 %v992
    %1111 = vmatprep.subr.bf16.mxu0 0
    %1112 = vmatpush2.bf16.msra.mxu0 0
    %1113 = vmatprep.subr.bf16.mxu0 0
    %1114 = vmatpush2.bf16.msra.mxu0 0
    %1115 = vmatprep.subr.bf16.mxu0 0
    %1116 = vmatpush2.bf16.msra.mxu0 0
    %1117 = vmatprep.subr.bf16.mxu0 0
    %1118 = vmatpush2.bf16.msra.mxu0 0
    %1119 = vmatprep.subr.bf16.mxu0 0
    %1120 = vmatpush2.bf16.msra.mxu0 0
    %1121 = vmatprep.subr.bf16.mxu0 0
    %1122 = vmatpush2.bf16.msra.mxu0 0
    %1123 = vmatprep.subr.bf16.mxu0 0
    %1124 = vmatpush2.bf16.msra.mxu0 0
    %1125 = vmatprep.subr.bf16.mxu0 0
    %1126 = vmatpush2.bf16.msra.mxu0 0
    %1127 = vmatprep.mubr.bf16.mxu0 0
    %1128 = vmatmul.mubr.bf16.gmra.mxu0 %v583
    %v1129 = vpop.f32.mrf.mxu0
    %v1130 = vadd.f32 %v888, %v1129
    %v1131 = vpop.f32.mrf.mxu0
    %v1132 = vadd.f32 %v890, %v1131
    %v1133 = vpop.f32.mrf.mxu0
    %v1134 = vpop.f32.mrf.mxu0
    %1135 = vdwg.mxu0
    %s1136 = scalar_lea.vmem %s6, 4
    %v1137 = vld [vmem:[%s1136] sm:$0xf]
    %v1139 = vlaneseq
    %v1140 = vshrl.u32 %v1139, 7
    %v1141 = vsub.s32 0, %v1140
    %v1142 = vrot.slane %v1137, %v1141
    %v1143 = vlaneseq
    %v1144 = vshrl.u32 %v1143, 7
    %v1145 = vsub.s32 1, %v1144
    %v1146 = vrot.slane %v1137, %v1145
    %v1147 = vlaneseq
    %v1148 = vshrl.u32 %v1147, 7
    %v1149 = vsub.s32 2, %v1148
    %v1150 = vrot.slane %v1137, %v1149
    %v1151 = vlaneseq
    %v1152 = vshrl.u32 %v1151, 7
    %v1153 = vsub.s32 3, %v1152
    %v1154 = vrot.slane %v1137, %v1153
    %v1159 = vadd.f32 %v1089, %v1142
    %v1160 = vadd.f32 %v1091, %v1146
    %v1161 = vadd.f32 %v1130, %v1150
    %v1162 = vadd.f32 %v1132, %v1154
    %v1163 = vxor.u32 %v1159, 2147483648
    %v1164 = vmul.f32 %v1163, 1.442695
    %v1165 = vpow.pop %v1164
    %v1166 = vadd.f32 %v1165, 1.0
    %v1167 = vrcp.pop %v1166
    %v1168 = vmul.f32 1.0, %v1167
    %v1169 = vxor.u32 %v1160, 2147483648
    %v1170 = vmul.f32 %v1169, 1.442695
    %v1171 = vpow.pop %v1170
    %v1172 = vadd.f32 %v1171, 1.0
    %v1173 = vrcp.pop %v1172
    %v1174 = vmul.f32 1.0, %v1173
    %v1175 = vtanh.pop %v1161
    %v1176 = vxor.u32 %v1162, 2147483648
    %v1177 = vmul.f32 %v1176, 1.442695
    %v1178 = vpow.pop %v1177
    %v1179 = vadd.f32 %v1178, 1.0
    %v1180 = vrcp.pop %v1179
    %v1181 = vmul.f32 1.0, %v1180
    %s1182 = scalar_lea.vmem %s2, 8
    %v1183 = vld [vmem:[%s1182] sm:$0xff]
    %v1184 = vmul.f32 %v1174, %v1183
    %v1185 = vmul.f32 %v1168, %v1175
    %v1186 = vadd.f32 %v1184, %v1185
    %v1187 = vtanh.pop %v1186
    %v1188 = vmul.f32 %v1181, %v1187
    %s1189 = scalar_lea.vmem %s7, 8
    %1190 = vst [vmem:[%s1189] sm:$0xff] %v1188
    %s1191 = scalar_lea.vmem %s8, 8
    %1192 = vst [vmem:[%s1191] sm:$0xff] %v1186
    // Predicated region
    $region42: #{stacked_lstm_forward.1} parent=1 // pred_check
      _
    $region43: #{stacked_lstm_forward.1} parent=1 // pred_check_branch
      %1194 = sbr.rel (0) target = $region45
    $region44: #{stacked_lstm_forward.1} parent=1 // pred_region
      _
    $region45: #{stacked_lstm_forward.1} parent=1 // pred_fallthru
      _
    // Predicated region
    $region46: #{stacked_lstm_forward.1} parent=1 // pred_check
      _
    $region47: #{stacked_lstm_forward.1} parent=1 // pred_check_branch
      %1196 = sbr.rel (0) target = $region49
    $region48: #{stacked_lstm_forward.1} parent=1 // pred_region
      _
    $region49: #{stacked_lstm_forward.1} parent=1 // pred_fallthru
      _
    // Predicated region
    $region50: #{stacked_lstm_forward.1} parent=1 // pred_check
      _
    $region51: #{stacked_lstm_forward.1} parent=1 // pred_check_branch
      %1198 = sbr.rel (0) target = $region53
    $region52: #{stacked_lstm_forward.1} parent=1 // pred_region
      _
    $region53: #{stacked_lstm_forward.1} parent=1 // pred_fallthru
      _
    // Predicated region
    $region54: #{stacked_lstm_forward.1} parent=1 // pred_check
      _
    $region55: #{stacked_lstm_forward.1} parent=1 // pred_check_branch
      %1200 = sbr.rel (0) target = $region57
    $region56: #{stacked_lstm_forward.1} parent=1 // pred_region
      _
    $region57: #{stacked_lstm_forward.1} parent=1 // pred_fallthru
      _
    %1201 = vsyncpa [#allocation3], 1
    %1202 = vsyncpa [#allocation5], 1

</llo_original>
